<compile_context>
chip_gen: v7x
topology: tpu7x:2x2x1
jax: 0.10.0
libtpu: 0.0.40
codegen_flags: <defaults>
</compile_context>

<pallas_src>
import jax
import jax.numpy as jnp
from jax.experimental import pallas as pl
from jax.experimental.pallas import tpu as pltpu

# ---------------- small synthetic sizes (stand-ins for BERT's 768) ----------------
HIDDEN = 32            # bert.config.hidden_size stand-in
BATCH = 2 * HIDDEN     # cat([h_cls[:H], h_cls[H:]], dim=1) semantics need B == 2H
SEQ = 8
VOCAB = 50
MLP_HIDDEN = 256


# ------------------------------- Pallas kernel ------------------------------------
def rsp_head_kernel(h_cls_ref, w1_ref, b1_ref, w2_ref, b2_ref, out_ref):
    # h_cls_ref: (2H, H)   w1_ref: (2H, 256)   b1_ref: (1, 256)
    # w2_ref:    (1, 256)  b2_ref: SMEM (1,)   out_ref: (H, 1)
    H = h_cls_ref.shape[0] // 2

    # Split-K form of  dot(cat([h_top, h_bot], axis=1), w1):
    #   z1 = h_top @ w1[:H] + h_bot @ w1[H:]
    # (no lane-axis concatenate; all slices are sublane-aligned views)
    z1 = jnp.dot(h_cls_ref[:H, :], w1_ref[:H, :],
                 preferred_element_type=jnp.float32)
    z1 = z1 + jnp.dot(h_cls_ref[H:, :], w1_ref[H:, :],
                      preferred_element_type=jnp.float32)

    # Linear(2H, 256) bias + ReLU
    a1 = jnp.maximum(z1 + b1_ref[...], 0.0)

    # Linear(256, 1): N=1 matmul done on VPU (multiply) + XLU (lane reduce)
    z2 = jnp.sum(a1 * w2_ref[...], axis=-1, keepdims=True) + b2_ref[0]

    # Sigmoid
    out_ref[...] = jax.nn.sigmoid(z2)


def rsp_head(h_cls, w1, b1, w2, b2):
    """h_cls: (2H, H) -> alpha: (H,)"""
    two_h, h = h_cls.shape
    assert two_h == 2 * h, "pairing semantics require batch == 2 * hidden_size"

    b1_2d = b1.reshape(1, MLP_HIDDEN)          # (1, 256)  VMEM
    w2_row = w2.reshape(1, MLP_HIDDEN)         # (1, 256)  VMEM (column -> row)
    b2_1d = b2.reshape(1).astype(jnp.float32)  # (1,)      SMEM scalar

    vmem = pl.BlockSpec(memory_space=pltpu.MemorySpace.VMEM)
    smem = pl.BlockSpec(memory_space=pltpu.MemorySpace.SMEM)

    out = pl.pallas_call(
        rsp_head_kernel,
        out_shape=jax.ShapeDtypeStruct((h, 1), jnp.float32),
        in_specs=[vmem, vmem, vmem, vmem, smem],
        out_specs=vmem,
    )(h_cls, w1, b1_2d, w2_row, b2_1d)
    return out[:, 0]   # alpha.squeeze()


# ---------------- synthetic deterministic "BERT" (plain-JAX glue) ------------------
def synthetic_encoder_cls(input_ids, attention_mask, emb_table, pos_table):
    tok = emb_table[input_ids]                       # (B, S, H)
    h = tok + pos_table[None, :, :]                  # add position embedding
    mask = attention_mask[..., None].astype(jnp.float32)
    ctx = (h * mask).sum(axis=1) / jnp.maximum(mask.sum(axis=1), 1.0)
    last_hidden = jnp.tanh(h + ctx[:, None, :])      # (B, S, H)
    return last_hidden[:, 0, :]                      # h_cls = [:, 0, :]


# ------------------------------------ main -----------------------------------------
if __name__ == "__main__":
    key = jax.random.PRNGKey(0)
    k_ids, k_mask, k_emb, k_pos, k_w1, k_b1, k_w2, k_b2 = jax.random.split(key, 8)

    # inputs
    input_ids = jax.random.randint(k_ids, (BATCH, SEQ), 0, VOCAB, dtype=jnp.int32)
    attention_mask = (jax.random.uniform(k_mask, (BATCH, SEQ)) > 0.2).astype(jnp.int32)
    attention_mask = attention_mask.at[:, 0].set(1)   # CLS always attended

    # deterministic parameters
    emb_table = 0.1 * jax.random.normal(k_emb, (VOCAB, HIDDEN), dtype=jnp.float32)
    pos_table = 0.1 * jax.random.normal(k_pos, (SEQ, HIDDEN), dtype=jnp.float32)
    w1 = 0.05 * jax.random.normal(k_w1, (2 * HIDDEN, MLP_HIDDEN), dtype=jnp.float32)
    b1 = 0.05 * jax.random.normal(k_b1, (MLP_HIDDEN,), dtype=jnp.float32)
    w2 = 0.05 * jax.random.normal(k_w2, (MLP_HIDDEN, 1), dtype=jnp.float32)
    b2 = 0.05 * jax.random.normal(k_b2, (1,), dtype=jnp.float32)

    # forward
    h_cls = synthetic_encoder_cls(input_ids, attention_mask, emb_table, pos_table)
    alpha = rsp_head(h_cls, w1, b1, w2, b2)
    alpha = jax.block_until_ready(alpha)

    # sanity check against a plain-JAX reference of the MLP head
    h_comb_ref = jnp.concatenate([h_cls[:HIDDEN], h_cls[HIDDEN:]], axis=1)
    ref = jax.nn.sigmoid(
        jnp.maximum(h_comb_ref @ w1 + b1, 0.0) @ w2 + b2)[:, 0]
    assert alpha.shape == (HIDDEN,)
    assert jnp.allclose(alpha, ref, atol=1e-5, rtol=1e-5)

    print("KERNEL_OK")
</pallas_src>

<mosaic_0001>
module attributes {stable_mosaic.version = 11 : i64} {
  func.func @rsp_head_kernel(%arg0: memref<64x32xf32, #tpu.memory_space<vmem>>, %arg1: memref<64x256xf32, #tpu.memory_space<vmem>>, %arg2: memref<1x256xf32, #tpu.memory_space<vmem>>, %arg3: memref<1x256xf32, #tpu.memory_space<vmem>>, %arg4: memref<1xf32, #tpu.memory_space<smem>>, %arg5: memref<32x1xf32, #tpu.memory_space<vmem>>) attributes {dimension_semantics = [], scalar_prefetch = 0 : i64, scratch_operands = 0 : i64, tpu.core_type = #tpu.core_type<tc>} {
    %c0 = arith.constant 0 : index
    %c0_0 = arith.constant 0 : index
    %0 = vector.load %arg0[%c0, %c0_0] : memref<64x32xf32, #tpu.memory_space<vmem>>, vector<32x32xf32>
    %c0_1 = arith.constant 0 : index
    %c0_2 = arith.constant 0 : index
    %1 = vector.load %arg1[%c0_1, %c0_2] : memref<64x256xf32, #tpu.memory_space<vmem>>, vector<32x256xf32>
    %cst = arith.constant dense<0.000000e+00> : vector<32x256xf32>
    %2 = tpu.matmul %0, %1, %cst {dimension_numbers = #tpu.dot_dimension_numbers<[1], [0], [0], [1], [0, 0, 1, 1], [], []>} : vector<32x32xf32>, vector<32x256xf32>, vector<32x256xf32> -> vector<32x256xf32>
    %c32 = arith.constant 32 : index
    %c0_3 = arith.constant 0 : index
    %3 = vector.load %arg0[%c32, %c0_3] : memref<64x32xf32, #tpu.memory_space<vmem>>, vector<32x32xf32>
    %c32_4 = arith.constant 32 : index
    %c0_5 = arith.constant 0 : index
    %4 = vector.load %arg1[%c32_4, %c0_5] : memref<64x256xf32, #tpu.memory_space<vmem>>, vector<32x256xf32>
    %cst_6 = arith.constant dense<0.000000e+00> : vector<32x256xf32>
    %5 = tpu.matmul %3, %4, %cst_6 {dimension_numbers = #tpu.dot_dimension_numbers<[1], [0], [0], [1], [0, 0, 1, 1], [], []>} : vector<32x32xf32>, vector<32x256xf32>, vector<32x256xf32> -> vector<32x256xf32>
    %6 = arith.addf %2, %5 : vector<32x256xf32>
    %c0_7 = arith.constant 0 : index
    %c0_8 = arith.constant 0 : index
    %7 = vector.load %arg2[%c0_7, %c0_8] : memref<1x256xf32, #tpu.memory_space<vmem>>, vector<1x256xf32>
    %8 = vector.broadcast %7 : vector<1x256xf32> to vector<32x256xf32>
    %9 = arith.addf %6, %8 : vector<32x256xf32>
    %cst_9 = arith.constant 0.000000e+00 : f32
    %10 = vector.broadcast %cst_9 : f32 to vector<32x256xf32>
    %11 = arith.maximumf %9, %10 : vector<32x256xf32>
    %c0_10 = arith.constant 0 : index
    %c0_11 = arith.constant 0 : index
    %12 = vector.load %arg3[%c0_10, %c0_11] : memref<1x256xf32, #tpu.memory_space<vmem>>, vector<1x256xf32>
    %13 = vector.broadcast %12 : vector<1x256xf32> to vector<32x256xf32>
    %14 = arith.mulf %11, %13 : vector<32x256xf32>
    %cst_12 = arith.constant dense<0.000000e+00> : vector<32xf32>
    %15 = vector.multi_reduction <add>, %14, %cst_12 [1] : vector<32x256xf32> to vector<32xf32>
    %16 = vector.shape_cast %15 : vector<32xf32> to vector<32x1xf32>
    %c0_13 = arith.constant 0 : index
    %17 = memref.load %arg4[%c0_13] : memref<1xf32, #tpu.memory_space<smem>>
    %18 = vector.broadcast %17 : f32 to vector<32x1xf32>
    %19 = arith.addf %16, %18 : vector<32x1xf32>
    %20 = arith.negf %19 : vector<32x1xf32>
    %21 = math.exp %20 : vector<32x1xf32>
    %cst_14 = arith.constant 1.000000e+00 : f32
    %22 = vector.broadcast %cst_14 : f32 to vector<32x1xf32>
    %23 = arith.addf %22, %21 : vector<32x1xf32>
    %24 = arith.divf %22, %23 : vector<32x1xf32>
    %c0_15 = arith.constant 0 : index
    %c0_16 = arith.constant 0 : index
    %25 = vector.load %arg5[%c0_15, %c0_16] : memref<32x1xf32, #tpu.memory_space<vmem>>, vector<32x1xf32>
    tpu.vector_store %arg5[%c0_15, %c0_16], %24 {strides = array<i32>} : memref<32x1xf32, #tpu.memory_space<vmem>>, vector<32x1xf32>,
    return
  }
}

</mosaic_0001>

<llo_original>
// kernel: tpu_custom_call.1
$region0: #{tpu_custom_call.1}
  #allocation0 [shape = 'u32[]', space=smem, size = 0x4, offset = 0x4, fixed_abs, tag = 'smem constant byte address 0x4 - core index']
  #allocation1 [shape = 'u32[144,128]{1,0:T(1,128)}', space=vmem, size = 0x12000, scoped, tag = 'internal scratch']
  #allocation2 [shape = 'f32[1]{0:T(128)S(6)}', space=smem, size = 0x200, scoped, tag = 'scoped memory for tpu_custom_call.1']
  %s0 = inlined_call_operand.vmem [shape: f32[64,32], index: 0, kind: input, shape index: {}]
  %s1 = inlined_call_operand.hbm [shape: f32[64,256], index: 1, kind: input, shape index: {}]
  %s2 = inlined_call_operand.vmem [shape: f32[1,256], index: 2, kind: input, shape index: {}]
  %s3 = inlined_call_operand.vmem [shape: f32[1,256], index: 3, kind: input, shape index: {}]
  %s4 = inlined_call_operand.<no memory space> [shape: f32[1], index: 4, kind: input, shape index: {}]
  %s5 = inlined_call_operand.vmem [shape: f32[32,1], index: 5, kind: output, shape index: {}]
  %s6 = sld [smem:[#allocation0]]
  $region34: #{tpu_custom_call.1} parent=0
    _
  %s8 = ssub.s32 1, %s6
  %s9 = scalar_select 0, %s8, %s6
  %10 = sst [smem:[#allocation2]] %s4
  $region1: #{tpu_custom_call.1} parent=0
    #allocation3 [shape = 'u8[65536]{0}', space=vmem, size = 0x10000, scoped, tag = 'input window, operand 1, single buffered']
    #allocation4 [shape = 's32[1]{0}', space=sflag, size = 0x4, scoped, tag = 'scoped memory for tpu_custom_call.1']
    %11 = vsyncpa [#allocation4], 0
    // Predicated region
    $region2: #{tpu_custom_call.1} parent=1 // pred_check
      _
    $region3: #{tpu_custom_call.1} parent=1 // pred_check_branch
      %13 = sbr.rel (0) target = $region5
    $region4: #{tpu_custom_call.1} parent=1 // pred_region
      _
    $region5: #{tpu_custom_call.1} parent=1 // pred_fallthru
      _
    // Predicated region
    $region6: #{tpu_custom_call.1} parent=1 // pred_check
      _
    $region7: #{tpu_custom_call.1} parent=1 // pred_check_branch
      %15 = sbr.rel (0) target = $region9
    $region8: #{tpu_custom_call.1} parent=1 // pred_region
      %s17 = ssub.s32 2048, 2048
      %18 = vsyncadd [#allocation4], %s17
      %s19 = sshll.u32 [#allocation3], 4
      %s20 = int_to_ptr.vmem [resolvable:$true] %s19
      %25 = dma.hbm_to_vmem [thread:$0]  %s1, 2048, %s20, [#allocation4], 256, 256, 16
    $region9: #{tpu_custom_call.1} parent=1 // pred_fallthru
      _
    // Predicated region
    $region10: #{tpu_custom_call.1} parent=1 // pred_check
      _
    $region11: #{tpu_custom_call.1} parent=1 // pred_check_branch
      %27 = sbr.rel (0) target = $region13
    $region12: #{tpu_custom_call.1} parent=1 // pred_region
      _
    $region13: #{tpu_custom_call.1} parent=1 // pred_fallthru
      _
    // Predicated region
    $region14: #{tpu_custom_call.1} parent=1 // pred_check
      _
    $region15: #{tpu_custom_call.1} parent=1 // pred_check_branch
      %29 = sbr.rel (0) target = $region17
    $region16: #{tpu_custom_call.1} parent=1 // pred_region
      _
    $region17: #{tpu_custom_call.1} parent=1 // pred_fallthru
      _
    // Predicated region
    $region18: #{tpu_custom_call.1} parent=1 // pred_check
      _
    $region19: #{tpu_custom_call.1} parent=1 // pred_check_branch
      %31 = sbr.rel (0) target = $region21
    $region20: #{tpu_custom_call.1} parent=1 // pred_region
      _
    $region21: #{tpu_custom_call.1} parent=1 // pred_fallthru
      _
    // Predicated region
    $region22: #{tpu_custom_call.1} parent=1 // pred_check
      _
    $region23: #{tpu_custom_call.1} parent=1 // pred_check_branch
      %33 = sbr.rel (0) target = $region25
    $region24: #{tpu_custom_call.1} parent=1 // pred_region
      %34 = dma.done [#allocation4], 2048
    $region25: #{tpu_custom_call.1} parent=1 // pred_fallthru
      _
    %v35 = vld [vmem:[%s0] sm:$0xff]
    %v36 = vld [vmem:[%s0 + $0x8] sm:$0xff]
    %v37 = vld [vmem:[%s0 + $0x10] sm:$0xff]
    %v38 = vld [vmem:[%s0 + $0x18] sm:$0xff]
    %v39 = vld [vmem:[#allocation3] sm:$0xff]
    %v40 = vld [vmem:[#allocation3 + $0x8] sm:$0xff]
    %v41 = vld [vmem:[#allocation3 + $0x10] sm:$0xff]
    %v42 = vld [vmem:[#allocation3 + $0x18] sm:$0xff]
    %v43 = vld [vmem:[#allocation3 + $0x20] sm:$0xff]
    %v44 = vld [vmem:[#allocation3 + $0x28] sm:$0xff]
    %v45 = vld [vmem:[#allocation3 + $0x30] sm:$0xff]
    %v46 = vld [vmem:[#allocation3 + $0x38] sm:$0xff]
    %v47 = vld [vmem:[%s0 + $0x20] sm:$0xff]
    %v48 = vld [vmem:[%s0 + $0x28] sm:$0xff]
    %v49 = vld [vmem:[%s0 + $0x30] sm:$0xff]
    %v50 = vld [vmem:[%s0 + $0x38] sm:$0xff]
    %v51 = vld [vmem:[#allocation3 + $0x40] sm:$0xff]
    %v52 = vld [vmem:[#allocation3 + $0x48] sm:$0xff]
    %v53 = vld [vmem:[#allocation3 + $0x50] sm:$0xff]
    %v54 = vld [vmem:[#allocation3 + $0x58] sm:$0xff]
    %v55 = vld [vmem:[#allocation3 + $0x60] sm:$0xff]
    %v56 = vld [vmem:[#allocation3 + $0x68] sm:$0xff]
    %v57 = vld [vmem:[#allocation3 + $0x70] sm:$0xff]
    %v58 = vld [vmem:[#allocation3 + $0x78] sm:$0xff]
    %vm59 = vcmask 261120
    %v61 = vsel %vm59, %v47, 0
    %v64 = vsel %vm59, %v48, 0
    %v67 = vsel %vm59, %v49, 0
    %v70 = vsel %vm59, %v50, 0
    %72 = vmatprep.subr.mxu0 %v52
    %73 = vmatpush1.msra.mxu0 %v51
    %74 = vmatprep.subr.mxu0 %v54
    %75 = vmatpush1.msra.mxu0 %v53
    %76 = vmatprep.subr.mxu0 %v56
    %77 = vmatpush1.msra.mxu0 %v55
    %78 = vmatprep.subr.mxu0 %v58
    %79 = vmatpush1.msra.mxu0 %v57
    %80 = vmatprep.subr.mxu0 0.0
    %81 = vmatpush1.msra.mxu0 0.0
    %82 = vmatprep.subr.mxu0 0.0
    %83 = vmatpush1.msra.mxu0 0.0
    %84 = vmatprep.subr.mxu0 0.0
    %85 = vmatpush1.msra.mxu0 0.0
    %86 = vmatprep.subr.mxu0 0.0
    %87 = vmatpush1.msra.mxu0 0.0
    %88 = vmatprep.subr.mxu0 0.0
    %89 = vmatpush1.msra.mxu0 0.0
    %90 = vmatprep.subr.mxu0 0.0
    %91 = vmatpush1.msra.mxu0 0.0
    %92 = vmatprep.subr.mxu0 0.0
    %93 = vmatpush1.msra.mxu0 0.0
    %94 = vmatprep.subr.mxu0 0.0
    %95 = vmatpush1.msra.mxu0 0.0
    %96 = vmatprep.subr.mxu0 0.0
    %97 = vmatpush1.msra.mxu0 0.0
    %98 = vmatprep.subr.mxu0 0.0
    %99 = vmatpush1.msra.mxu0 0.0
    %100 = vmatprep.subr.mxu0 0.0
    %101 = vmatpush1.msra.mxu0 0.0
    %102 = vmatprep.subr.mxu0 0.0
    %103 = vmatpush1.msra.mxu0 0.0
    %104 = vmatprep.subr.mxu0 0.0
    %105 = vmatpush1.msra.mxu0 0.0
    %106 = vmatprep.subr.mxu0 0.0
    %107 = vmatpush1.msra.mxu0 0.0
    %108 = vmatprep.subr.mxu0 0.0
    %109 = vmatpush1.msra.mxu0 0.0
    %110 = vmatprep.subr.mxu0 0.0
    %111 = vmatpush1.msra.mxu0 0.0
    %112 = vmatprep.subr.mxu0 0.0
    %113 = vmatpush1.msra.mxu0 0.0
    %114 = vmatprep.subr.mxu0 0.0
    %115 = vmatpush1.msra.mxu0 0.0
    %116 = vmatprep.subr.mxu0 0.0
    %117 = vmatpush1.msra.mxu0 0.0
    %118 = vmatprep.subr.mxu0 0.0
    %119 = vmatpush1.msra.mxu0 0.0
    %120 = vmatprep.subr.mxu0 0.0
    %121 = vmatpush1.msra.mxu0 0.0
    %122 = vmatprep.subr.mxu0 0.0
    %123 = vmatpush1.msra.mxu0 0.0
    %124 = vmatprep.subr.mxu0 0.0
    %125 = vmatpush1.msra.mxu0 0.0
    %126 = vmatprep.subr.mxu0 0.0
    %127 = vmatpush1.msra.mxu0 0.0
    %128 = vmatprep.subr.mxu0 0.0
    %129 = vmatpush1.msra.mxu0 0.0
    %130 = vmatprep.subr.mxu0 0.0
    %131 = vmatpush1.msra.mxu0 0.0
    %132 = vmatprep.subr.mxu0 0.0
    %133 = vmatpush1.msra.mxu0 0.0
    %134 = vmatprep.subr.mxu0 0.0
    %135 = vmatpush1.msra.mxu0 0.0
    %136 = vmatprep.mubr.f32.mxu0 0.0
    %137 = vmatmul.mubr.f32.gmra.mrb[0].mxu0 %v61
    %v138 = vpop.f32.mrb[0].mxu0
    %v139 = vadd.f32 0.0, %v138
    %v140 = vpop.f32.mrb[0].mxu0
    %v141 = vadd.f32 0.0, %v140
    %142 = vmatprep.mubr.f32.mxu0 0.0
    %143 = vmatmul.mubr.f32.gmra.mrb[0].mxu0 %v64
    %v144 = vpop.f32.mrb[0].mxu0
    %v145 = vadd.f32 0.0, %v144
    %v146 = vpop.f32.mrb[0].mxu0
    %v147 = vadd.f32 0.0, %v146
    %148 = vmatprep.mubr.f32.mxu0 0.0
    %149 = vmatmul.mubr.f32.gmra.mrb[0].mxu0 %v67
    %v150 = vpop.f32.mrb[0].mxu0
    %v151 = vadd.f32 0.0, %v150
    %v152 = vpop.f32.mrb[0].mxu0
    %v153 = vadd.f32 0.0, %v152
    %154 = vmatprep.mubr.f32.mxu0 0.0
    %155 = vmatmul.mubr.f32.gmra.mrb[0].mxu0 %v70
    %v156 = vpop.f32.mrb[0].mxu0
    %v157 = vadd.f32 0.0, %v156
    %v158 = vpop.f32.mrb[0].mxu0
    %v159 = vadd.f32 0.0, %v158
    %160 = vdwg.mxu0
    %v162 = vsel %vm59, %v35, 0
    %v165 = vsel %vm59, %v36, 0
    %v168 = vsel %vm59, %v37, 0
    %v171 = vsel %vm59, %v38, 0
    %173 = vmatprep.subr.mxu0 %v40
    %174 = vmatpush1.msra.mxu0 %v39
    %175 = vmatprep.subr.mxu0 %v42
    %176 = vmatpush1.msra.mxu0 %v41
    %177 = vmatprep.subr.mxu0 %v44
    %178 = vmatpush1.msra.mxu0 %v43
    %179 = vmatprep.subr.mxu0 %v46
    %180 = vmatpush1.msra.mxu0 %v45
    %181 = vmatprep.subr.mxu0 0.0
    %182 = vmatpush1.msra.mxu0 0.0
    %183 = vmatprep.subr.mxu0 0.0
    %184 = vmatpush1.msra.mxu0 0.0
    %185 = vmatprep.subr.mxu0 0.0
    %186 = vmatpush1.msra.mxu0 0.0
    %187 = vmatprep.subr.mxu0 0.0
    %188 = vmatpush1.msra.mxu0 0.0
    %189 = vmatprep.subr.mxu0 0.0
    %190 = vmatpush1.msra.mxu0 0.0
    %191 = vmatprep.subr.mxu0 0.0
    %192 = vmatpush1.msra.mxu0 0.0
    %193 = vmatprep.subr.mxu0 0.0
    %194 = vmatpush1.msra.mxu0 0.0
    %195 = vmatprep.subr.mxu0 0.0
    %196 = vmatpush1.msra.mxu0 0.0
    %197 = vmatprep.subr.mxu0 0.0
    %198 = vmatpush1.msra.mxu0 0.0
    %199 = vmatprep.subr.mxu0 0.0
    %200 = vmatpush1.msra.mxu0 0.0
    %201 = vmatprep.subr.mxu0 0.0
    %202 = vmatpush1.msra.mxu0 0.0
    %203 = vmatprep.subr.mxu0 0.0
    %204 = vmatpush1.msra.mxu0 0.0
    %205 = vmatprep.subr.mxu0 0.0
    %206 = vmatpush1.msra.mxu0 0.0
    %207 = vmatprep.subr.mxu0 0.0
    %208 = vmatpush1.msra.mxu0 0.0
    %209 = vmatprep.subr.mxu0 0.0
    %210 = vmatpush1.msra.mxu0 0.0
    %211 = vmatprep.subr.mxu0 0.0
    %212 = vmatpush1.msra.mxu0 0.0
    %213 = vmatprep.subr.mxu0 0.0
    %214 = vmatpush1.msra.mxu0 0.0
    %215 = vmatprep.subr.mxu0 0.0
    %216 = vmatpush1.msra.mxu0 0.0
    %217 = vmatprep.subr.mxu0 0.0
    %218 = vmatpush1.msra.mxu0 0.0
    %219 = vmatprep.subr.mxu0 0.0
    %220 = vmatpush1.msra.mxu0 0.0
    %221 = vmatprep.subr.mxu0 0.0
    %222 = vmatpush1.msra.mxu0 0.0
    %223 = vmatprep.subr.mxu0 0.0
    %224 = vmatpush1.msra.mxu0 0.0
    %225 = vmatprep.subr.mxu0 0.0
    %226 = vmatpush1.msra.mxu0 0.0
    %227 = vmatprep.subr.mxu0 0.0
    %228 = vmatpush1.msra.mxu0 0.0
    %229 = vmatprep.subr.mxu0 0.0
    %230 = vmatpush1.msra.mxu0 0.0
    %231 = vmatprep.subr.mxu0 0.0
    %232 = vmatpush1.msra.mxu0 0.0
    %233 = vmatprep.subr.mxu0 0.0
    %234 = vmatpush1.msra.mxu0 0.0
    %235 = vmatprep.subr.mxu0 0.0
    %236 = vmatpush1.msra.mxu0 0.0
    %237 = vmatprep.mubr.f32.mxu0 0.0
    %238 = vmatmul.mubr.f32.gmra.mrb[0].mxu0 %v162
    %v239 = vpop.f32.mrb[0].mxu0
    %v240 = vadd.f32 %v139, %v239
    %v241 = vpop.f32.mrb[0].mxu0
    %v242 = vadd.f32 %v141, %v241
    %243 = vmatprep.mubr.f32.mxu0 0.0
    %244 = vmatmul.mubr.f32.gmra.mrb[0].mxu0 %v165
    %v245 = vpop.f32.mrb[0].mxu0
    %v246 = vadd.f32 %v145, %v245
    %v247 = vpop.f32.mrb[0].mxu0
    %v248 = vadd.f32 %v147, %v247
    %249 = vmatprep.mubr.f32.mxu0 0.0
    %250 = vmatmul.mubr.f32.gmra.mrb[0].mxu0 %v168
    %v251 = vpop.f32.mrb[0].mxu0
    %v252 = vadd.f32 %v151, %v251
    %v253 = vpop.f32.mrb[0].mxu0
    %v254 = vadd.f32 %v153, %v253
    %255 = vmatprep.mubr.f32.mxu0 0.0
    %256 = vmatmul.mubr.f32.gmra.mrb[0].mxu0 %v171
    %v257 = vpop.f32.mrb[0].mxu0
    %v258 = vadd.f32 %v157, %v257
    %v259 = vpop.f32.mrb[0].mxu0
    %v260 = vadd.f32 %v159, %v259
    %261 = vdwg.mxu0
    %v262 = vld [vmem:[%s2] sm:$0x3]
    %v264 = vlaneseq
    %v265 = vshrl.u32 %v264, 7
    %v266 = vsub.s32 0, %v265
    %v267 = vrot.slane %v262, %v266
    %v268 = vlaneseq
    %v269 = vshrl.u32 %v268, 7
    %v270 = vsub.s32 1, %v269
    %v271 = vrot.slane %v262, %v270
    %v274 = vadd.f32 %v240, %v267
    %v275 = vadd.f32 %v242, %v271
    %v276 = vadd.f32 %v246, %v267
    %v277 = vadd.f32 %v248, %v271
    %v278 = vadd.f32 %v252, %v267
    %v279 = vadd.f32 %v254, %v271
    %v280 = vadd.f32 %v258, %v267
    %v281 = vadd.f32 %v260, %v271
    %v282 = vmax.f32 %v274, 0.0
    %v283 = vmax.f32 %v275, 0.0
    %v284 = vmax.f32 %v276, 0.0
    %v285 = vmax.f32 %v277, 0.0
    %v286 = vmax.f32 %v278, 0.0
    %v287 = vmax.f32 %v279, 0.0
    %v288 = vmax.f32 %v280, 0.0
    %v289 = vmax.f32 %v281, 0.0
    %v290 = vld [vmem:[%s3] sm:$0x3]
    %v292 = vlaneseq
    %v293 = vshrl.u32 %v292, 7
    %v294 = vsub.s32 0, %v293
    %v295 = vrot.slane %v290, %v294
    %v296 = vlaneseq
    %v297 = vshrl.u32 %v296, 7
    %v298 = vsub.s32 1, %v297
    %v299 = vrot.slane %v290, %v298
    %v302 = vmul.f32 %v282, %v295
    %v303 = vmul.f32 %v283, %v299
    %v304 = vmul.f32 %v284, %v295
    %v305 = vmul.f32 %v285, %v299
    %v306 = vmul.f32 %v286, %v295
    %v307 = vmul.f32 %v287, %v299
    %v308 = vmul.f32 %v288, %v295
    %v309 = vmul.f32 %v289, %v299
    %v310 = vadd.f32 %v302, %v303
    %311 = vadd.xlane.f32.xlu0 %v310
    %v312 = vpop.xlane.xlu0 %311
    %v313 = vadd.f32 %v304, %v305
    %314 = vadd.xlane.f32.xlu0 %v313
    %v315 = vpop.xlane.xlu0 %314
    %v316 = vadd.f32 %v306, %v307
    %317 = vadd.xlane.f32.xlu0 %v316
    %v318 = vpop.xlane.xlu0 %317
    %v319 = vadd.f32 %v308, %v309
    %320 = vadd.xlane.f32.xlu0 %v319
    %v321 = vpop.xlane.xlu0 %320
    %s322 = sld [smem:[#allocation2]]
    %v323 = vstv %s322
    %v324 = vadd.f32 %v312, %v323
    %v325 = vadd.f32 %v315, %v323
    %v326 = vadd.f32 %v318, %v323
    %v327 = vadd.f32 %v321, %v323
    %v328 = vxor.u32 %v324, 2147483648
    %v329 = vxor.u32 %v325, 2147483648
    %v330 = vxor.u32 %v326, 2147483648
    %v331 = vxor.u32 %v327, 2147483648
    %v332 = vmul.f32 %v328, 1.442695
    %v333 = vpow.pop %v332
    %v334 = vmul.f32 %v329, 1.442695
    %v335 = vpow.pop %v334
    %v336 = vmul.f32 %v330, 1.442695
    %v337 = vpow.pop %v336
    %v338 = vmul.f32 %v331, 1.442695
    %v339 = vpow.pop %v338
    %v340 = vadd.f32 %v333, 1.0
    %v341 = vadd.f32 %v335, 1.0
    %v342 = vadd.f32 %v337, 1.0
    %v343 = vadd.f32 %v339, 1.0
    %v344 = vrcp.pop %v340
    %v345 = vmul.f32 1.0, %v344
    %v346 = vrcp.pop %v341
    %v347 = vmul.f32 1.0, %v346
    %v348 = vrcp.pop %v342
    %v349 = vmul.f32 1.0, %v348
    %v350 = vrcp.pop %v343
    %v351 = vmul.f32 1.0, %v350
    %vm352 = vcmask 7168
    %353 = vst.msk [vmem:[%s5] sm:$0xff] %vm352, %v345
    %354 = vst.msk [vmem:[%s5 + $0x8] sm:$0xff] %vm352, %v347
    %355 = vst.msk [vmem:[%s5 + $0x10] sm:$0xff] %vm352, %v349
    %356 = vst.msk [vmem:[%s5 + $0x18] sm:$0xff] %vm352, %v351
    // Predicated region
    $region26: #{tpu_custom_call.1} parent=1 // pred_check
      _
    $region27: #{tpu_custom_call.1} parent=1 // pred_check_branch
      %358 = sbr.rel (0) target = $region29
    $region28: #{tpu_custom_call.1} parent=1 // pred_region
      _
    $region29: #{tpu_custom_call.1} parent=1 // pred_fallthru
      _
    // Predicated region
    $region30: #{tpu_custom_call.1} parent=1 // pred_check
      _
    $region31: #{tpu_custom_call.1} parent=1 // pred_check_branch
      %360 = sbr.rel (0) target = $region33
    $region32: #{tpu_custom_call.1} parent=1 // pred_region
      _
    $region33: #{tpu_custom_call.1} parent=1 // pred_fallthru
      _
    %361 = vsyncpa [#allocation4], 1

</llo_original>
